<compile_context>
chip_gen: v6e
topology: v6e:2x2x1
jax: 0.10.0
libtpu: 0.0.40
codegen_flags: <defaults>
</compile_context>

<pallas_src>
import jax
import jax.numpy as jnp
from jax.experimental import pallas as pl
from jax.experimental.pallas import tpu as pltpu


def _classifier_kernel(w_ref, x_ref, o_ref):
    # w_ref: (C_out, C_in)  — 1x1 conv weight, grid-invariant block
    # x_ref: (C_in,  TN)    — channels on sublanes, batch*spatial tile on lanes
    # o_ref: (C_out, TN)
    o_ref[...] = jnp.dot(
        w_ref[...], x_ref[...], preferred_element_type=jnp.float32
    ).astype(o_ref.dtype)


def classifier_forward(x, w, *, tile_n=512):
    """Bias-free 1x1 conv, NCHW in / NCHW out, as a single channel matmul."""
    B, Cin, H, W = x.shape
    Cout, Cin_w = w.shape
    assert Cin == Cin_w, (Cin, Cin_w)
    N = B * H * W

    # (B, C, H, W) -> (C, B*H*W): channels on sublanes, everything else lanes.
    xf = jnp.transpose(x, (1, 0, 2, 3)).reshape(Cin, N)

    # Lane tile: multiple of 128, no larger than needed.
    tn = max(128, min(tile_n, pl.cdiv(N, 128) * 128))
    tn = (tn // 128) * 128
    n_pad = pl.cdiv(N, tn) * tn
    if n_pad != N:
        xf = jnp.pad(xf, ((0, 0), (0, n_pad - N)))

    out = pl.pallas_call(
        _classifier_kernel,
        out_shape=jax.ShapeDtypeStruct((Cout, n_pad), x.dtype),
        grid=(n_pad // tn,),
        in_specs=[
            pl.BlockSpec((Cout, Cin), lambda i: (0, 0)),   # resident weight
            pl.BlockSpec((Cin, tn), lambda i: (0, i)),     # lane tile of x
        ],
        out_specs=pl.BlockSpec((Cout, tn), lambda i: (0, i)),
        compiler_params=pltpu.CompilerParams(
            dimension_semantics=("parallel",)),
    )(w, xf)

    out = out[:, :N].reshape(Cout, B, H, W)
    return jnp.transpose(out, (1, 0, 2, 3))


def classifier_reference(x, w):
    """Pure-JAX (XLA) reference: Conv2d(Cin->Cout, 1x1, bias=False)."""
    return jnp.einsum("oc,bchw->bohw", w, x,
                      precision=jax.lax.Precision.HIGHEST)


if __name__ == "__main__":
    B, Cin, Cout, H, W = 2, 4, 8, 16, 16
    key = jax.random.PRNGKey(0)
    kx, kw = jax.random.split(key)
    x = jax.random.normal(kx, (B, Cin, H, W), dtype=jnp.float32)
    # PyTorch Conv2d weight is (Cout, Cin, 1, 1); squeeze the 1x1 taps.
    w4 = 0.3 * jax.random.normal(kw, (Cout, Cin, 1, 1), dtype=jnp.float32)
    w = w4.reshape(Cout, Cin)

    out = classifier_forward(x, w)
    out = jax.block_until_ready(out)

    ref = classifier_reference(x, w)
    max_err = float(jnp.max(jnp.abs(out - ref)))
    assert out.shape == (B, Cout, H, W), out.shape
    assert max_err < 1e-4, f"mismatch vs reference: {max_err}"
    print("KERNEL_OK")
</pallas_src>

<mosaic_0001>
module attributes {stable_mosaic.version = 11 : i64} {
  func.func @_classifier_kernel(%arg0: i32, %arg1: memref<8x4xf32, #tpu.memory_space<vmem>>, %arg2: memref<4x512xf32, #tpu.memory_space<vmem>>, %arg3: memref<8x512xf32, #tpu.memory_space<vmem>>) attributes {dimension_semantics = [#tpu.dimension_semantics<parallel>], iteration_bounds = array<i64: 1>, scalar_prefetch = 0 : i64, scratch_operands = 0 : i64, tpu.core_type = #tpu.core_type<tc>, window_params = [{pipeline_mode = #tpu.pipeline_mode<synchronous>, transform_indices = @transform_0, window_bounds = array<i64: 8, 4>}, {transform_indices = @transform_1, window_bounds = array<i64: 4, 512>}, {transform_indices = @transform_2, window_bounds = array<i64: 8, 512>}]} {
    %c0 = arith.constant 0 : index
    %c0_0 = arith.constant 0 : index
    %0 = vector.load %arg1[%c0, %c0_0] : memref<8x4xf32, #tpu.memory_space<vmem>>, vector<8x4xf32>
    %c0_1 = arith.constant 0 : index
    %c0_2 = arith.constant 0 : index
    %1 = vector.load %arg2[%c0_1, %c0_2] : memref<4x512xf32, #tpu.memory_space<vmem>>, vector<4x512xf32>
    %cst = arith.constant dense<0.000000e+00> : vector<8x512xf32>
    %2 = tpu.matmul %0, %1, %cst {dimension_numbers = #tpu.dot_dimension_numbers<[1], [0], [0], [1], [0, 0, 1, 1], [], []>} : vector<8x4xf32>, vector<4x512xf32>, vector<8x512xf32> -> vector<8x512xf32>
    %c0_3 = arith.constant 0 : index
    %c0_4 = arith.constant 0 : index
    %3 = vector.load %arg3[%c0_3, %c0_4] : memref<8x512xf32, #tpu.memory_space<vmem>>, vector<8x512xf32>
    tpu.vector_store %arg3[%c0_3, %c0_4], %2 {strides = array<i32>} : memref<8x512xf32, #tpu.memory_space<vmem>>, vector<8x512xf32>,
    return
  }
  func.func @transform_0(%arg0: i32) -> (i32, i32) {
    %c0_i32 = arith.constant 0 : i32
    %c0_i32_0 = arith.constant 0 : i32
    %c0_i32_1 = arith.constant 0 : i32
    return %c0_i32, %c0_i32_0 : i32, i32
  }
  func.func @transform_1(%arg0: i32) -> (i32, i32) {
    %c0_i32 = arith.constant 0 : i32
    %c0_i32_0 = arith.constant 0 : i32
    return %c0_i32, %arg0 : i32, i32
  }
  func.func @transform_2(%arg0: i32) -> (i32, i32) {
    %c0_i32 = arith.constant 0 : i32
    %c0_i32_0 = arith.constant 0 : i32
    return %c0_i32, %arg0 : i32, i32
  }
}

</mosaic_0001>

<llo_original>
// kernel: tpu_custom_call.1
$region0: #{tpu_custom_call.1}
  #allocation0 [shape = 'u32[]', space=smem, size = 0x4, offset = 0x4, fixed_abs, tag = 'smem constant byte address 0x4 - core index']
  #allocation1 [shape = 'u32[144,128]{1,0:T(1,128)}', space=vmem, size = 0x12000, scoped, tag = 'internal scratch']
  %s0 = inlined_call_operand.vmem [shape: f32[8,4], index: 0, kind: input, shape index: {}]
  %s1 = inlined_call_operand.hbm [shape: f32[4,512], index: 1, kind: input, shape index: {}]
  %s2 = inlined_call_operand.hbm [shape: f32[8,512], index: 2, kind: output, shape index: {}]
  %s3 = sld [smem:[#allocation0]]
  $region22: #{tpu_custom_call.1} parent=0
    _
  %s5 = ssub.s32 1, %s3
  %s6 = scalar_select 0, %s5, %s3
  $region1: #{tpu_custom_call.1} parent=0
    #allocation2 [shape = 'u8[8192]{0}', space=vmem, size = 0x2000, scoped, tag = 'input window, operand 1, single buffered']
    #allocation3 [shape = 's32[1]{0}', space=sflag, size = 0x4, scoped, tag = 'scoped memory for tpu_custom_call.1']
    #allocation4 [shape = 's32[1]{0}', space=sflag, size = 0x4, scoped, tag = 'scoped memory for tpu_custom_call.1']
    #allocation5 [shape = 'u8[16384]{0}', space=vmem, size = 0x4000, scoped, tag = 'output window, operand 0, single buffered']
    %7 = vsyncpa [#allocation3], 0
    %8 = vsyncpa [#allocation4], 0
    // Predicated region
    $region2: #{tpu_custom_call.1} parent=1 // pred_check
      _
    $region3: #{tpu_custom_call.1} parent=1 // pred_check_branch
      %10 = sbr.rel (0) target = $region5
    $region4: #{tpu_custom_call.1} parent=1 // pred_region
      _
    $region5: #{tpu_custom_call.1} parent=1 // pred_fallthru
      _
    // Predicated region
    $region6: #{tpu_custom_call.1} parent=1 // pred_check
      _
    $region7: #{tpu_custom_call.1} parent=1 // pred_check_branch
      %12 = sbr.rel (0) target = $region9
    $region8: #{tpu_custom_call.1} parent=1 // pred_region
      %s14 = ssub.s32 256, 256
      %15 = vsyncadd [#allocation3], %s14
      %s17 = sshll.u32 [#allocation2], 4
      %s18 = int_to_ptr.vmem [resolvable:$true] %s17
      %20 = dma.hbm_to_vmem [thread:$0]  %s1, 256, %s18, [#allocation3]
    $region9: #{tpu_custom_call.1} parent=1 // pred_fallthru
      _
    // Predicated region
    $region10: #{tpu_custom_call.1} parent=1 // pred_check
      _
    $region11: #{tpu_custom_call.1} parent=1 // pred_check_branch
      %22 = sbr.rel (0) target = $region13
    $region12: #{tpu_custom_call.1} parent=1 // pred_region
      %23 = dma.done [#allocation3], 256
    $region13: #{tpu_custom_call.1} parent=1 // pred_fallthru
      _
    %v24 = vld [vmem:[%s0] sm:$0xff]
    %v25 = vld [vmem:[#allocation2] sm:$0xff]
    %v26 = vld [vmem:[#allocation2 + $0x8] sm:$0xff]
    %v29 = vcombine.high %v25, %v25
    %v30 = vcombine.high %v26, %v26
    %vm31 = vcmask 31744
    %v33 = vsel %vm31, %v24, 0
    %vm35 = vcmask 1043456
    %v36 = vsel %vm35, %v25, 0
    %v38 = vsel %vm35, %v29, 0
    %v40 = vsel %vm35, %v26, 0
    %v42 = vsel %vm35, %v30, 0
    %44 = vmatprep.subr.mxu0 0.0
    %45 = vmatpush1.msra.mxu0 0.0
    %46 = vmatprep.subr.mxu0 0.0
    %47 = vmatpush1.msra.mxu0 0.0
    %48 = vmatprep.subr.mxu0 0.0
    %49 = vmatpush1.msra.mxu0 0.0
    %50 = vmatprep.subr.mxu0 0.0
    %51 = vmatpush1.msra.mxu0 0.0
    %52 = vmatprep.subr.mxu0 0.0
    %53 = vmatpush1.msra.mxu0 0.0
    %54 = vmatprep.subr.mxu0 0.0
    %55 = vmatpush1.msra.mxu0 0.0
    %56 = vmatprep.subr.mxu0 0.0
    %57 = vmatpush1.msra.mxu0 0.0
    %58 = vmatprep.subr.mxu0 0.0
    %59 = vmatpush1.msra.mxu0 0.0
    %60 = vmatprep.subr.mxu0 0.0
    %61 = vmatpush1.msra.mxu0 0.0
    %62 = vmatprep.subr.mxu0 0.0
    %63 = vmatpush1.msra.mxu0 0.0
    %64 = vmatprep.subr.mxu0 0.0
    %65 = vmatpush1.msra.mxu0 0.0
    %66 = vmatprep.subr.mxu0 0.0
    %67 = vmatpush1.msra.mxu0 0.0
    %68 = vmatprep.subr.mxu0 0.0
    %69 = vmatpush1.msra.mxu0 0.0
    %70 = vmatprep.subr.mxu0 0.0
    %71 = vmatpush1.msra.mxu0 0.0
    %72 = vmatprep.subr.mxu0 0.0
    %73 = vmatpush1.msra.mxu0 0.0
    %74 = vmatprep.subr.mxu0 %v38
    %75 = vmatpush1.msra.mxu0 %v36
    %76 = vmatprep.subr.mxu0 0.0
    %77 = vmatpush2.msra.mxu0 0.0
    %78 = vmatprep.subr.mxu0 0.0
    %79 = vmatpush2.msra.mxu0 0.0
    %80 = vmatprep.subr.mxu0 0.0
    %81 = vmatpush2.msra.mxu0 0.0
    %82 = vmatprep.subr.mxu0 0.0
    %83 = vmatpush2.msra.mxu0 0.0
    %84 = vmatprep.subr.mxu0 0.0
    %85 = vmatpush2.msra.mxu0 0.0
    %86 = vmatprep.subr.mxu0 0.0
    %87 = vmatpush2.msra.mxu0 0.0
    %88 = vmatprep.subr.mxu0 0.0
    %89 = vmatpush2.msra.mxu0 0.0
    %90 = vmatprep.subr.mxu0 0.0
    %91 = vmatpush2.msra.mxu0 0.0
    %92 = vmatprep.subr.mxu0 0.0
    %93 = vmatpush2.msra.mxu0 0.0
    %94 = vmatprep.subr.mxu0 0.0
    %95 = vmatpush2.msra.mxu0 0.0
    %96 = vmatprep.subr.mxu0 0.0
    %97 = vmatpush2.msra.mxu0 0.0
    %98 = vmatprep.subr.mxu0 0.0
    %99 = vmatpush2.msra.mxu0 0.0
    %100 = vmatprep.subr.mxu0 0.0
    %101 = vmatpush2.msra.mxu0 0.0
    %102 = vmatprep.subr.mxu0 0.0
    %103 = vmatpush2.msra.mxu0 0.0
    %104 = vmatprep.subr.mxu0 0.0
    %105 = vmatpush2.msra.mxu0 0.0
    %106 = vmatprep.subr.mxu0 0.0
    %107 = vmatpush2.msra.mxu0 0.0
    %108 = vmatprep.mubr.f32.mxu0 0.0
    %109 = vmatmul.mubr.f32.gmra.mxu0 %v33
    %v110 = vpop.f32.mrf.mxu0
    %v111 = vadd.f32 0.0, %v110
    %v112 = vpop.f32.mrf.mxu0
    %v113 = vadd.f32 0.0, %v112
    %114 = vdwg.mxu0
    %115 = vmatprep.subr.mxu0 0.0
    %116 = vmatpush1.msra.mxu0 0.0
    %117 = vmatprep.subr.mxu0 0.0
    %118 = vmatpush1.msra.mxu0 0.0
    %119 = vmatprep.subr.mxu0 0.0
    %120 = vmatpush1.msra.mxu0 0.0
    %121 = vmatprep.subr.mxu0 0.0
    %122 = vmatpush1.msra.mxu0 0.0
    %123 = vmatprep.subr.mxu0 0.0
    %124 = vmatpush1.msra.mxu0 0.0
    %125 = vmatprep.subr.mxu0 0.0
    %126 = vmatpush1.msra.mxu0 0.0
    %127 = vmatprep.subr.mxu0 0.0
    %128 = vmatpush1.msra.mxu0 0.0
    %129 = vmatprep.subr.mxu0 0.0
    %130 = vmatpush1.msra.mxu0 0.0
    %131 = vmatprep.subr.mxu0 0.0
    %132 = vmatpush1.msra.mxu0 0.0
    %133 = vmatprep.subr.mxu0 0.0
    %134 = vmatpush1.msra.mxu0 0.0
    %135 = vmatprep.subr.mxu0 0.0
    %136 = vmatpush1.msra.mxu0 0.0
    %137 = vmatprep.subr.mxu0 0.0
    %138 = vmatpush1.msra.mxu0 0.0
    %139 = vmatprep.subr.mxu0 0.0
    %140 = vmatpush1.msra.mxu0 0.0
    %141 = vmatprep.subr.mxu0 0.0
    %142 = vmatpush1.msra.mxu0 0.0
    %143 = vmatprep.subr.mxu0 0.0
    %144 = vmatpush1.msra.mxu0 0.0
    %145 = vmatprep.subr.mxu0 %v42
    %146 = vmatpush1.msra.mxu0 %v40
    %147 = vmatprep.subr.mxu0 0.0
    %148 = vmatpush2.msra.mxu0 0.0
    %149 = vmatprep.subr.mxu0 0.0
    %150 = vmatpush2.msra.mxu0 0.0
    %151 = vmatprep.subr.mxu0 0.0
    %152 = vmatpush2.msra.mxu0 0.0
    %153 = vmatprep.subr.mxu0 0.0
    %154 = vmatpush2.msra.mxu0 0.0
    %155 = vmatprep.subr.mxu0 0.0
    %156 = vmatpush2.msra.mxu0 0.0
    %157 = vmatprep.subr.mxu0 0.0
    %158 = vmatpush2.msra.mxu0 0.0
    %159 = vmatprep.subr.mxu0 0.0
    %160 = vmatpush2.msra.mxu0 0.0
    %161 = vmatprep.subr.mxu0 0.0
    %162 = vmatpush2.msra.mxu0 0.0
    %163 = vmatprep.subr.mxu0 0.0
    %164 = vmatpush2.msra.mxu0 0.0
    %165 = vmatprep.subr.mxu0 0.0
    %166 = vmatpush2.msra.mxu0 0.0
    %167 = vmatprep.subr.mxu0 0.0
    %168 = vmatpush2.msra.mxu0 0.0
    %169 = vmatprep.subr.mxu0 0.0
    %170 = vmatpush2.msra.mxu0 0.0
    %171 = vmatprep.subr.mxu0 0.0
    %172 = vmatpush2.msra.mxu0 0.0
    %173 = vmatprep.subr.mxu0 0.0
    %174 = vmatpush2.msra.mxu0 0.0
    %175 = vmatprep.subr.mxu0 0.0
    %176 = vmatpush2.msra.mxu0 0.0
    %177 = vmatprep.subr.mxu0 0.0
    %178 = vmatpush2.msra.mxu0 0.0
    %179 = vmatprep.mubr.f32.mxu0 0.0
    %180 = vmatmul.mubr.f32.gmra.mxu0 %v33
    %v181 = vpop.f32.mrf.mxu0
    %v182 = vadd.f32 0.0, %v181
    %v183 = vpop.f32.mrf.mxu0
    %v184 = vadd.f32 0.0, %v183
    %185 = vdwg.mxu0
    %186 = vst [vmem:[#allocation5] sm:$0xff] %v111
    %187 = vst [vmem:[#allocation5 + $0x8] sm:$0xff] %v113
    %188 = vst [vmem:[#allocation5 + $0x10] sm:$0xff] %v182
    %189 = vst [vmem:[#allocation5 + $0x18] sm:$0xff] %v184
    // Predicated region
    $region14: #{tpu_custom_call.1} parent=1 // pred_check
      _
    $region15: #{tpu_custom_call.1} parent=1 // pred_check_branch
      %191 = sbr.rel (0) target = $region17
    $region16: #{tpu_custom_call.1} parent=1 // pred_region
      %s193 = ssub.s32 512, 512
      %194 = vsyncadd [#allocation4], %s193
      %s196 = sshll.u32 [#allocation5], 4
      %s197 = int_to_ptr.vmem [resolvable:$true] %s196
      %199 = dma.vmem_to_hbm [thread:$0]  %s197, 512, %s2, [#allocation4]
    $region17: #{tpu_custom_call.1} parent=1 // pred_fallthru
      _
    // Predicated region
    $region18: #{tpu_custom_call.1} parent=1 // pred_check
      _
    $region19: #{tpu_custom_call.1} parent=1 // pred_check_branch
      %201 = sbr.rel (0) target = $region21
    $region20: #{tpu_custom_call.1} parent=1 // pred_region
      %202 = dma.done [#allocation4], 512
    $region21: #{tpu_custom_call.1} parent=1 // pred_fallthru
      _
    %203 = vsyncpa [#allocation3], 1
    %204 = vsyncpa [#allocation4], 1

</llo_original>
